<compile_context>
chip_gen: v5e
topology: v5e:2x2
jax: 0.10.0
libtpu: 0.0.40
codegen_flags: <defaults>
</compile_context>

<pallas_src>
import jax
import jax.numpy as jnp
from jax.experimental import pallas as pl
from jax.experimental.pallas import tpu as pltpu


def _conv1x1_noise_kernel(x_ref, w_ref, nb_ref, o_ref):
    # x_ref:  (Cin_p,  HW_pad)  zero-padded input for one batch element
    # w_ref:  (Cout_p, Cin_p)   1x1 conv weights (zero padded)
    # nb_ref: (Cout_p, HW_pad)  bias + noise, pre-broadcast over Wp
    # o_ref:  (Cout_p, HW_pad)
    o_ref[...] = (
        jnp.dot(w_ref[...], x_ref[...], preferred_element_type=jnp.float32)
        + nb_ref[...]
    ).astype(o_ref.dtype)


def model_forward(x, weight, bias, noise):
    """x: (N, Cin, H, W) f32; weight: (Cout, Cin, 1, 1); bias: (Cout,);
    noise: (N, Cout, H+2)  (stands in for torch.randn(v1.shape[:-1]))."""
    N, Cin, H, W = x.shape
    Cout = weight.shape[0]
    Hp, Wp = H + 2, W + 2
    HW = Hp * Wp

    LANE, SUB = 128, 8
    HW_pad = ((HW + LANE - 1) // LANE) * LANE
    Cout_p = ((Cout + SUB - 1) // SUB) * SUB
    Cin_p = ((Cin + SUB - 1) // SUB) * SUB

    # padding=1 with a 1x1 kernel: zero-pad spatially; on the padded border
    # the conv reduces to bias (+ noise). Flatten (hp, wp) onto the lane axis.
    # No transposes: data stays in (N, C, spatial) order end to end.
    x_pad = jnp.pad(x, ((0, 0), (0, 0), (1, 1), (1, 1)))
    x3d = x_pad.reshape(N, Cin, HW)
    x3d = jnp.pad(x3d, ((0, 0), (0, Cin_p - Cin), (0, HW_pad - HW)))

    w2d = jnp.pad(weight.reshape(Cout, Cin),
                  ((0, Cout_p - Cout), (0, Cin_p - Cin)))

    # Bias folded into the noise addend; broadcast over Wp in the wrapper
    # (shape-only op, fused by XLA) instead of building it in-kernel.
    nb = noise + bias[None, :, None]                                 # (N, Cout, Hp)
    nb = jnp.broadcast_to(nb[..., None], (N, Cout, Hp, Wp)).reshape(N, Cout, HW)
    nb = jnp.pad(nb, ((0, 0), (0, Cout_p - Cout), (0, HW_pad - HW)))

    # Only split across cores when per-step work beats the per-step overhead.
    semantics = ("parallel",) if HW >= 4096 else ("arbitrary",)

    out_bytes = 4 * N * Cout_p * HW_pad
    cost = pl.CostEstimate(
        flops=2 * N * Cout_p * Cin_p * HW_pad,
        transcendentals=0,
        bytes_accessed=4 * (x3d.size + w2d.size + nb.size) + out_bytes,
    )

    out_p = pl.pallas_call(
        _conv1x1_noise_kernel,
        out_shape=jax.ShapeDtypeStruct((N, Cout_p, HW_pad), jnp.float32),
        grid_spec=pltpu.PrefetchScalarGridSpec(
            num_scalar_prefetch=0,
            grid=(N,),
            in_specs=[
                pl.BlockSpec((None, Cin_p, HW_pad), lambda n: (n, 0, 0)),
                pl.BlockSpec((Cout_p, Cin_p), lambda n: (0, 0)),
                pl.BlockSpec((None, Cout_p, HW_pad), lambda n: (n, 0, 0)),
            ],
            out_specs=pl.BlockSpec((None, Cout_p, HW_pad), lambda n: (n, 0, 0)),
        ),
        compiler_params=pltpu.CompilerParams(dimension_semantics=semantics),
        cost_estimate=cost,
    )(x3d, w2d, nb)

    return out_p[:, :Cout, :HW].reshape(N, Cout, Hp, Wp)


def reference_forward(x, weight, bias, noise):
    # Pure-JAX reference for sanity checking.
    x_pad = jnp.pad(x, ((0, 0), (0, 0), (1, 1), (1, 1)))
    w2d = weight.reshape(weight.shape[0], weight.shape[1])
    v1 = jnp.einsum("nchw,oc->nohw", x_pad, w2d) + bias[None, :, None, None]
    return v1 + noise[..., None]


if __name__ == "__main__":
    key = jax.random.PRNGKey(0)
    k_x, k_w, k_b, k_n = jax.random.split(key, 4)

    # Small shapes consistent with the module: Cin=3, Cout=27 fixed by
    # Conv2d(3, 27, 1); use batch=2, spatial=16.
    N, Cin, H, W = 2, 3, 16, 16
    Cout = 27

    x1 = jax.random.normal(k_x, (N, Cin, H, W), dtype=jnp.float32)
    weight = jax.random.normal(k_w, (Cout, Cin, 1, 1), dtype=jnp.float32) * 0.1
    bias = jax.random.normal(k_b, (Cout,), dtype=jnp.float32) * 0.1
    # The "v2 = torch.randn(v1.shape[:-1])" tensor, generated deterministically.
    noise = jax.random.normal(k_n, (N, Cout, H + 2), dtype=jnp.float32)

    out = jax.jit(model_forward)(x1, weight, bias, noise)
    out = jax.block_until_ready(out)

    ref = reference_forward(x1, weight, bias, noise)
    assert out.shape == (N, Cout, H + 2, W + 2)
    assert jnp.allclose(out, ref, atol=1e-5, rtol=1e-5)

    print("KERNEL_OK")
</pallas_src>

<mosaic_0001>
module attributes {stable_mosaic.version = 11 : i64} {
  func.func @_conv1x1_noise_kernel(%arg0: i32, %arg1: memref<1x8x384xf32, #tpu.memory_space<vmem>>, %arg2: memref<32x8xf32, #tpu.memory_space<vmem>>, %arg3: memref<1x32x384xf32, #tpu.memory_space<vmem>>, %arg4: memref<1x32x384xf32, #tpu.memory_space<vmem>>) attributes {dimension_semantics = [#tpu.dimension_semantics<arbitrary>], iteration_bounds = array<i64: 2>, scalar_prefetch = 0 : i64, scratch_operands = 0 : i64, tpu.core_type = #tpu.core_type<tc>, window_params = [{transform_indices = @transform_0, window_bounds = array<i64: 1, 8, 384>}, {pipeline_mode = #tpu.pipeline_mode<synchronous>, transform_indices = @transform_1, window_bounds = array<i64: 32, 8>}, {transform_indices = @transform_2, window_bounds = array<i64: 1, 32, 384>}, {transform_indices = @transform_3, window_bounds = array<i64: 1, 32, 384>}]} {
    %c0 = arith.constant 0 : index
    %c0_0 = arith.constant 0 : index
    %0 = vector.load %arg2[%c0, %c0_0] : memref<32x8xf32, #tpu.memory_space<vmem>>, vector<32x8xf32>
    %c0_1 = arith.constant 0 : index
    %c0_2 = arith.constant 0 : index
    %c0_3 = arith.constant 0 : index
    %1 = vector.load %arg1[%c0_1, %c0_2, %c0_3] : memref<1x8x384xf32, #tpu.memory_space<vmem>>, vector<1x8x384xf32>
    %2 = vector.shape_cast %1 : vector<1x8x384xf32> to vector<8x384xf32>
    %cst = arith.constant dense<0.000000e+00> : vector<32x384xf32>
    %3 = tpu.matmul %0, %2, %cst {dimension_numbers = #tpu.dot_dimension_numbers<[1], [0], [0], [1], [0, 0, 1, 1], [], []>} : vector<32x8xf32>, vector<8x384xf32>, vector<32x384xf32> -> vector<32x384xf32>
    %c0_4 = arith.constant 0 : index
    %c0_5 = arith.constant 0 : index
    %c0_6 = arith.constant 0 : index
    %4 = vector.load %arg3[%c0_4, %c0_5, %c0_6] : memref<1x32x384xf32, #tpu.memory_space<vmem>>, vector<1x32x384xf32>
    %5 = vector.shape_cast %4 : vector<1x32x384xf32> to vector<32x384xf32>
    %6 = arith.addf %3, %5 : vector<32x384xf32>
    %c0_7 = arith.constant 0 : index
    %c0_8 = arith.constant 0 : index
    %c0_9 = arith.constant 0 : index
    %7 = vector.load %arg4[%c0_7, %c0_8, %c0_9] : memref<1x32x384xf32, #tpu.memory_space<vmem>>, vector<1x32x384xf32>
    %8 = vector.shape_cast %7 : vector<1x32x384xf32> to vector<32x384xf32>
    %9 = vector.shape_cast %6 : vector<32x384xf32> to vector<1x32x384xf32>
    tpu.vector_store %arg4[%c0_7, %c0_8, %c0_9], %9 {strides = array<i32>} : memref<1x32x384xf32, #tpu.memory_space<vmem>>, vector<1x32x384xf32>,
    return
  }
  func.func @transform_0(%arg0: i32) -> (i32, i32, i32) {
    %c0_i32 = arith.constant 0 : i32
    %c0_i32_0 = arith.constant 0 : i32
    %c0_i32_1 = arith.constant 0 : i32
    return %arg0, %c0_i32, %c0_i32_0 : i32, i32, i32
  }
  func.func @transform_1(%arg0: i32) -> (i32, i32) {
    %c0_i32 = arith.constant 0 : i32
    %c0_i32_0 = arith.constant 0 : i32
    %c0_i32_1 = arith.constant 0 : i32
    return %c0_i32, %c0_i32_0 : i32, i32
  }
  func.func @transform_2(%arg0: i32) -> (i32, i32, i32) {
    %c0_i32 = arith.constant 0 : i32
    %c0_i32_0 = arith.constant 0 : i32
    %c0_i32_1 = arith.constant 0 : i32
    return %arg0, %c0_i32, %c0_i32_0 : i32, i32, i32
  }
  func.func @transform_3(%arg0: i32) -> (i32, i32, i32) {
    %c0_i32 = arith.constant 0 : i32
    %c0_i32_0 = arith.constant 0 : i32
    %c0_i32_1 = arith.constant 0 : i32
    return %arg0, %c0_i32, %c0_i32_0 : i32, i32, i32
  }
}

</mosaic_0001>

<llo_original>
// kernel: model_forward.1
$region0: #{model_forward.1}
  #allocation0 [shape = 'u32[]', space=smem, size = 0x4, offset = 0x4, fixed_abs, tag = 'smem constant byte address 0x4 - core index']
  #allocation1 [shape = 'u32[72,128]{1,0:T(1,128)}', space=vmem, size = 0x9000, scoped, tag = 'internal scratch']
  %s0 = inlined_call_operand.vmem [shape: f32[2,8,384], index: 0, kind: input, shape index: {}]
  %s1 = inlined_call_operand.vmem [shape: f32[32,8], index: 1, kind: input, shape index: {}]
  %s2 = inlined_call_operand.vmem [shape: f32[2,32,384], index: 2, kind: input, shape index: {}]
  %s3 = inlined_call_operand.vmem [shape: f32[2,32,384], index: 3, kind: output, shape index: {}]
  %s4 = sld [smem:[#allocation0]]
  $region45: #{model_forward.1} parent=0
    _
  %s6 = ssub.s32 1, %s4
  %s7 = scalar_select 0, %s6, %s4
  loop: start=0, step=1, limit=4
  $region2: #{model_forward.1} parent=0 // loop_pre_header
    _
  $region3: #{model_forward.1} parent=0 // loop_header
    %s9 = sphi 0, %s13
    %p10 = scmp.ge.s32.totalorder %s9, 4
    %s19 = sphi 0, %s21
    %s22 = sphi 0, %s19
    %s23 = sphi 0, %s22
    %s39 = sphi 0, %s23
    %s43 = sphi 0, %s43
    %s45 = sphi 0, %s43
    %s46 = sphi 0, %s45
    %s60 = sphi 0, %s46
    %s66 = sphi 0, %s68
    %s69 = sphi 0, %s66
    %s70 = sphi 0, %s69
    %s86 = sphi 0, %s70
    %s92 = sphi 0, %s94
    %s95 = sphi 0, %s92
    %s96 = sphi 0, %s95
    %s112 = sphi 0, %s96
  $region4: #{model_forward.1} parent=0 // loop_header_branch
    %12 = sbr.rel (%p10) target = $region8
  $region5: #{model_forward.1} parent=0 // loop_body
    %s14 = ssub.s32 %s9, 1
    %s15 = ssub.s32 %s9, 2
    %s16 = sadd.s32 %s9, 1
    %s17 = ssub.s32 %s9, %s16
    %p18 = scmp.eq.s32.totalorder %s17, 0
    %s20 = sadd.s32 %s19, 1
    %s21 = scalar_select %p18, %s19, %s20
    %p24 = pneg %p18
    %p25 = scmp.eq.s32.totalorder %s9, 1
    %p26 = por %p24, %p25
    %p27 = scmp.ne.s32.totalorder %s19, %s22
    %p28 = scmp.eq.s32.totalorder %s9, 0
    %p29 = por %p27, %p28
    %p30 = scmp.ne.s32.totalorder %s19, %s22
    %p31 = scmp.eq.s32.totalorder %s14, 1
    %p32 = por %p30, %p31
    %p33 = scmp.ne.s32.totalorder %s22, %s23
    %p34 = scmp.eq.s32.totalorder %s14, 0
    %p35 = por %p33, %p34
    %p36 = scmp.ne.s32.totalorder %s22, %s23
    %p37 = scmp.eq.s32.totalorder %s15, 1
    %p38 = por %p36, %p37
    %p40 = scmp.ne.s32.totalorder %s23, %s39
    %p41 = scmp.eq.s32.totalorder %s15, 0
    %p42 = por %p40, %p41
    %s44 = sadd.s32 %s43, 1
    %p47 = scmp.eq.s32.totalorder %s9, 1
    %p48 = scmp.ne.s32.totalorder %s43, %s45
    %p49 = scmp.eq.s32.totalorder %s9, 0
    %p50 = por %p48, %p49
    %p51 = scmp.ne.s32.totalorder %s43, %s45
    %p52 = scmp.eq.s32.totalorder %s14, 1
    %p53 = por %p51, %p52
    %p54 = scmp.ne.s32.totalorder %s45, %s46
    %p55 = scmp.eq.s32.totalorder %s14, 0
    %p56 = por %p54, %p55
    %p57 = scmp.ne.s32.totalorder %s45, %s46
    %p58 = scmp.eq.s32.totalorder %s15, 1
    %p59 = por %p57, %p58
    %p61 = scmp.ne.s32.totalorder %s46, %s60
    %p62 = scmp.eq.s32.totalorder %s15, 0
    %p63 = por %p61, %p62
    %s64 = ssub.s32 %s9, %s16
    %p65 = scmp.eq.s32.totalorder %s64, 0
    %s67 = sadd.s32 %s66, 1
    %s68 = scalar_select %p65, %s66, %s67
    %p71 = pneg %p65
    %p72 = scmp.eq.s32.totalorder %s9, 1
    %p73 = por %p71, %p72
    %p74 = scmp.ne.s32.totalorder %s66, %s69
    %p75 = scmp.eq.s32.totalorder %s9, 0
    %p76 = por %p74, %p75
    %p77 = scmp.ne.s32.totalorder %s66, %s69
    %p78 = scmp.eq.s32.totalorder %s14, 1
    %p79 = por %p77, %p78
    %p80 = scmp.ne.s32.totalorder %s69, %s70
    %p81 = scmp.eq.s32.totalorder %s14, 0
    %p82 = por %p80, %p81
    %p83 = scmp.ne.s32.totalorder %s69, %s70
    %p84 = scmp.eq.s32.totalorder %s15, 1
    %p85 = por %p83, %p84
    %p87 = scmp.ne.s32.totalorder %s70, %s86
    %p88 = scmp.eq.s32.totalorder %s15, 0
    %p89 = por %p87, %p88
    %s90 = ssub.s32 %s9, %s16
    %p91 = scmp.eq.s32.totalorder %s90, 0
    %s93 = sadd.s32 %s92, 1
    %s94 = scalar_select %p91, %s92, %s93
    %p97 = pneg %p91
    %p98 = scmp.eq.s32.totalorder %s9, 1
    %p99 = por %p97, %p98
    %p100 = scmp.ne.s32.totalorder %s92, %s95
    %p101 = scmp.eq.s32.totalorder %s9, 0
    %p102 = por %p100, %p101
    %p103 = scmp.ne.s32.totalorder %s92, %s95
    %p104 = scmp.eq.s32.totalorder %s14, 1
    %p105 = por %p103, %p104
    %p106 = scmp.ne.s32.totalorder %s95, %s96
    %p107 = scmp.eq.s32.totalorder %s14, 0
    %p108 = por %p106, %p107
    %p109 = scmp.ne.s32.totalorder %s95, %s96
    %p110 = scmp.eq.s32.totalorder %s15, 1
    %p111 = por %p109, %p110
    %p113 = scmp.ne.s32.totalorder %s96, %s112
    %p114 = scmp.eq.s32.totalorder %s15, 0
    %p115 = por %p113, %p114
    %p116 = scmp.le.s32.totalorder 1, %s9
    %p117 = scmp.lt.s32.totalorder %s9, 3
    %p118 = pnand %p116, %p117
    %p119 = pneg %p118
    // Predicated region
    $region9: #{model_forward.1} parent=5 // pred_check
      _
    $region10: #{model_forward.1} parent=5 // pred_check_branch
      %121 = sbr.rel (%p118) target = $region12
    $region11: #{model_forward.1} parent=5 // pred_region
      %s122 = ssub.s32 %s9, 1
      // Predicated region
      $region13: #{model_forward.1} parent=11 // pred_check
        %p123 = pneg %p56
      $region14: #{model_forward.1} parent=11 // pred_check_branch
        %125 = sbr.rel (%p123) target = $region16
      $region15: #{model_forward.1} parent=11 // pred_region
        _
      $region16: #{model_forward.1} parent=11 // pred_fallthru
        _
    $region12: #{model_forward.1} parent=5 // pred_fallthru
      _
    %p126 = scmp.lt.s32.totalorder %s9, 2
    // Predicated region
    $region17: #{model_forward.1} parent=5 // pred_check
      %p127 = pneg %p126
    $region18: #{model_forward.1} parent=5 // pred_check_branch
      %129 = sbr.rel (%p127) target = $region20
    $region19: #{model_forward.1} parent=5 // pred_region
      // Predicated region
      $region21: #{model_forward.1} parent=19 // pred_check
        %p130 = pneg %p29
      $region22: #{model_forward.1} parent=19 // pred_check_branch
        %132 = sbr.rel (%p130) target = $region24
      $region23: #{model_forward.1} parent=19 // pred_region
        %p133 = scmp.lt.s32.totalorder %s9, 1
        %s134 = scalar_select %p133, %s9, 1
        %s135 = smul.addr %s134, 3
        %s136 = smul.addr %s135, 8
        %s137 = scalar_lea.vmem %s0, %s136
      $region24: #{model_forward.1} parent=19 // pred_fallthru
        _
      // Predicated region
      $region25: #{model_forward.1} parent=19 // pred_check
        %p138 = pneg %p76
      $region26: #{model_forward.1} parent=19 // pred_check_branch
        %140 = sbr.rel (%p138) target = $region28
      $region27: #{model_forward.1} parent=19 // pred_region
        %p141 = scmp.lt.s32.totalorder %s9, 1
        %s142 = scalar_select %p141, %s9, 1
        %s143 = smul.addr %s142, 12
        %s144 = smul.addr %s143, 8
        %s145 = scalar_lea.vmem %s2, %s144
      $region28: #{model_forward.1} parent=19 // pred_fallthru
        _
    $region20: #{model_forward.1} parent=5 // pred_fallthru
      _
    %p146 = scmp.le.s32.totalorder 1, %s9
    %p147 = scmp.lt.s32.totalorder %s9, 3
    %p148 = pnand %p146, %p147
    %p149 = pneg %p148
    // Predicated region
    $region29: #{model_forward.1} parent=5 // pred_check
      _
    $region30: #{model_forward.1} parent=5 // pred_check_branch
      %151 = sbr.rel (%p148) target = $region32
    $region31: #{model_forward.1} parent=5 // pred_region
      %s152 = ssub.s32 %s9, 1
      %p153 = scmp.lt.s32.totalorder %s14, 1
      %s154 = scalar_select %p153, %s14, 1
      %s155 = smul.addr %s154, 3
      %s156 = smul.addr %s155, 8
      %s157 = scalar_lea.vmem %s0, %s156
      %p158 = pneg %p35
      %p159 = pneg %p32
      %p160 = pneg %p56
      %p161 = pneg %p53
      %p162 = scmp.lt.s32.totalorder %s14, 1
      %s163 = scalar_select %p162, %s14, 1
      %s164 = smul.addr %s163, 12
      %s165 = smul.addr %s164, 8
      %s166 = scalar_lea.vmem %s2, %s165
      %p167 = pneg %p82
      %p168 = pneg %p79
      %p169 = pneg %p108
      %p170 = pneg %p105
      %p171 = scmp.lt.s32.totalorder %s14, 1
      %s172 = scalar_select %p171, %s14, 1
      %s173 = smul.addr %s172, 12
      %s174 = smul.addr %s173, 8
      %s175 = scalar_lea.vmem %s3, %s174
      %p176 = scmp.lt.s32.totalorder %s14, 1
      %s177 = scalar_select %p176, %s14, 1
      %s178 = smul.addr %s177, 3
      %s179 = smul.addr %s178, 8
      %s180 = scalar_lea.vmem %s0, %s179
      %p181 = scmp.lt.s32.totalorder %s14, 1
      %s182 = scalar_select %p181, %s14, 1
      %s183 = smul.addr %s182, 12
      %s184 = smul.addr %s183, 8
      %s185 = scalar_lea.vmem %s2, %s184
      %p186 = scmp.lt.s32.totalorder %s14, 1
      %s187 = scalar_select %p186, %s14, 1
      %s188 = smul.addr %s187, 12
      %s189 = smul.addr %s188, 8
      %s190 = scalar_lea.vmem %s3, %s189
      %v191 = vld [vmem:[%s1] sm:$0xff]
      %v192 = vld [vmem:[%s1 + $0x8] sm:$0xff]
      %v193 = vld [vmem:[%s1 + $0x10] sm:$0xff]
      %v194 = vld [vmem:[%s1 + $0x18] sm:$0xff]
      %v195 = vld [vmem:[%s180] sm:$0xff]
      %v196 = vld [vmem:[%s180 + $0x8] sm:$0xff]
      %v197 = vld [vmem:[%s180 + $0x10] sm:$0xff]
      %v198 = vld [vmem:[%s185] sm:$0xff]
      %v199 = vld [vmem:[%s185 + $0x8] sm:$0xff]
      %v200 = vld [vmem:[%s185 + $0x10] sm:$0xff]
      %v201 = vld [vmem:[%s185 + $0x18] sm:$0xff]
      %v202 = vld [vmem:[%s185 + $0x20] sm:$0xff]
      %v203 = vld [vmem:[%s185 + $0x28] sm:$0xff]
      %v204 = vld [vmem:[%s185 + $0x30] sm:$0xff]
      %v205 = vld [vmem:[%s185 + $0x38] sm:$0xff]
      %v206 = vld [vmem:[%s185 + $0x40] sm:$0xff]
      %v207 = vld [vmem:[%s185 + $0x48] sm:$0xff]
      %v208 = vld [vmem:[%s185 + $0x50] sm:$0xff]
      %v209 = vld [vmem:[%s185 + $0x58] sm:$0xff]
      %vm210 = vcmask 64512
      %v212 = vsel %vm210, %v191, 0
      %v215 = vsel %vm210, %v192, 0
      %v218 = vsel %vm210, %v193, 0
      %v221 = vsel %vm210, %v194, 0
      %223 = vmatpush.msra.mxu0 0.0
      %224 = vmatpush.msra.mxu0 0.0
      %225 = vmatpush.msra.mxu0 0.0
      %226 = vmatpush.msra.mxu0 0.0
      %227 = vmatpush.msra.mxu0 0.0
      %228 = vmatpush.msra.mxu0 0.0
      %229 = vmatpush.msra.mxu0 0.0
      %230 = vmatpush.msra.mxu0 0.0
      %231 = vmatpush.msra.mxu0 0.0
      %232 = vmatpush.msra.mxu0 0.0
      %233 = vmatpush.msra.mxu0 0.0
      %234 = vmatpush.msra.mxu0 0.0
      %235 = vmatpush.msra.mxu0 0.0
      %236 = vmatpush.msra.mxu0 0.0
      %237 = vmatpush.msra.mxu0 0.0
      %238 = vmatpush.msra.mxu0 %v195
      %239 = vmatmul.f32.gmra.mxu0 %v212
      %v240 = vpop.f32.mrf.mxu0
      %v241 = vadd.f32 %v198, %v240
      %242 = vmatmul.f32.gmra.mxu0 %v215
      %v243 = vpop.f32.mrf.mxu0
      %v244 = vadd.f32 %v201, %v243
      %245 = vmatmul.f32.gmra.mxu0 %v218
      %v246 = vpop.f32.mrf.mxu0
      %v247 = vadd.f32 %v204, %v246
      %248 = vmatmul.f32.gmra.mxu0 %v221
      %v249 = vpop.f32.mrf.mxu0
      %v250 = vadd.f32 %v207, %v249
      %251 = vdwg.mxu0
      %252 = vmatpush.msra.mxu0 0.0
      %253 = vmatpush.msra.mxu0 0.0
      %254 = vmatpush.msra.mxu0 0.0
      %255 = vmatpush.msra.mxu0 0.0
      %256 = vmatpush.msra.mxu0 0.0
      %257 = vmatpush.msra.mxu0 0.0
      %258 = vmatpush.msra.mxu0 0.0
      %259 = vmatpush.msra.mxu0 0.0
      %260 = vmatpush.msra.mxu0 0.0
      %261 = vmatpush.msra.mxu0 0.0
      %262 = vmatpush.msra.mxu0 0.0
      %263 = vmatpush.msra.mxu0 0.0
      %264 = vmatpush.msra.mxu0 0.0
      %265 = vmatpush.msra.mxu0 0.0
      %266 = vmatpush.msra.mxu0 0.0
      %267 = vmatpush.msra.mxu0 %v196
      %268 = vmatmul.f32.gmra.mxu0 %v212
      %v269 = vpop.f32.mrf.mxu0
      %v270 = vadd.f32 %v199, %v269
      %271 = vmatmul.f32.gmra.mxu0 %v215
      %v272 = vpop.f32.mrf.mxu0
      %v273 = vadd.f32 %v202, %v272
      %274 = vmatmul.f32.gmra.mxu0 %v218
      %v275 = vpop.f32.mrf.mxu0
      %v276 = vadd.f32 %v205, %v275
      %277 = vmatmul.f32.gmra.mxu0 %v221
      %v278 = vpop.f32.mrf.mxu0
      %v279 = vadd.f32 %v208, %v278
      %280 = vdwg.mxu0
      %281 = vmatpush.msra.mxu0 0.0
      %282 = vmatpush.msra.mxu0 0.0
      %283 = vmatpush.msra.mxu0 0.0
      %284 = vmatpush.msra.mxu0 0.0
      %285 = vmatpush.msra.mxu0 0.0
      %286 = vmatpush.msra.mxu0 0.0
      %287 = vmatpush.msra.mxu0 0.0
      %288 = vmatpush.msra.mxu0 0.0
      %289 = vmatpush.msra.mxu0 0.0
      %290 = vmatpush.msra.mxu0 0.0
      %291 = vmatpush.msra.mxu0 0.0
      %292 = vmatpush.msra.mxu0 0.0
      %293 = vmatpush.msra.mxu0 0.0
      %294 = vmatpush.msra.mxu0 0.0
      %295 = vmatpush.msra.mxu0 0.0
      %296 = vmatpush.msra.mxu0 %v197
      %297 = vmatmul.f32.gmra.mxu0 %v212
      %v298 = vpop.f32.mrf.mxu0
      %v299 = vadd.f32 %v200, %v298
      %300 = vmatmul.f32.gmra.mxu0 %v215
      %v301 = vpop.f32.mrf.mxu0
      %v302 = vadd.f32 %v203, %v301
      %303 = vmatmul.f32.gmra.mxu0 %v218
      %v304 = vpop.f32.mrf.mxu0
      %v305 = vadd.f32 %v206, %v304
      %306 = vmatmul.f32.gmra.mxu0 %v221
      %v307 = vpop.f32.mrf.mxu0
      %v308 = vadd.f32 %v209, %v307
      %309 = vdwg.mxu0
      %310 = vst [vmem:[%s190] sm:$0xff] %v241
      %311 = vst [vmem:[%s190 + $0x8] sm:$0xff] %v270
      %312 = vst [vmem:[%s190 + $0x10] sm:$0xff] %v299
      %313 = vst [vmem:[%s190 + $0x18] sm:$0xff] %v244
      %314 = vst [vmem:[%s190 + $0x20] sm:$0xff] %v273
      %315 = vst [vmem:[%s190 + $0x28] sm:$0xff] %v302
      %316 = vst [vmem:[%s190 + $0x30] sm:$0xff] %v247
      %317 = vst [vmem:[%s190 + $0x38] sm:$0xff] %v276
      %318 = vst [vmem:[%s190 + $0x40] sm:$0xff] %v305
      %319 = vst [vmem:[%s190 + $0x48] sm:$0xff] %v250
      %320 = vst [vmem:[%s190 + $0x50] sm:$0xff] %v279
      %321 = vst [vmem:[%s190 + $0x58] sm:$0xff] %v308
      %p322 = scmp.lt.s32.totalorder %s14, 1
      %s323 = scalar_select %p322, %s14, 1
      %s324 = smul.addr %s323, 12
      %s325 = smul.addr %s324, 8
      %s326 = scalar_lea.vmem %s3, %s325
      // Predicated region
      $region33: #{model_forward.1} parent=31 // pred_check
        %p327 = pneg %p105
      $region34: #{model_forward.1} parent=31 // pred_check_branch
        %329 = sbr.rel (%p327) target = $region36
      $region35: #{model_forward.1} parent=31 // pred_region
        _
      $region36: #{model_forward.1} parent=31 // pred_fallthru
        _
    $region32: #{model_forward.1} parent=5 // pred_fallthru
      _
    %p330 = scmp.le.s32.totalorder 2, %s9
    // Predicated region
    $region37: #{model_forward.1} parent=5 // pred_check
      %p331 = pneg %p330
    $region38: #{model_forward.1} parent=5 // pred_check_branch
      %333 = sbr.rel (%p331) target = $region40
    $region39: #{model_forward.1} parent=5 // pred_region
      %s334 = ssub.s32 %s9, 2
      // Predicated region
      $region41: #{model_forward.1} parent=39 // pred_check
        %p335 = pneg %p111
      $region42: #{model_forward.1} parent=39 // pred_check_branch
        %337 = sbr.rel (%p335) target = $region44
      $region43: #{model_forward.1} parent=39 // pred_region
        %p338 = scmp.lt.s32.totalorder %s15, 1
        %s339 = scalar_select %p338, %s15, 1
        %s340 = smul.addr %s339, 12
        %s341 = smul.addr %s340, 8
        %s342 = scalar_lea.vmem %s3, %s341
      $region44: #{model_forward.1} parent=39 // pred_fallthru
        _
    $region40: #{model_forward.1} parent=5 // pred_fallthru
      _
  $region6: #{model_forward.1} parent=0 // loop_footer
    %s13 = sadd.s32 1, %s9
  $region7: #{model_forward.1} parent=0 // loop_footer_branch
    %8 = sbr.rel target = $region3
  $region8: #{model_forward.1} parent=0 // loop_exit
    _

</llo_original>
